<compile_context>
chip_gen: v7x
topology: tpu7x:2x2x1
jax: 0.10.0
libtpu: 0.0.40
codegen_flags: <defaults>
</compile_context>

<pallas_src>
import jax
import jax.numpy as jnp
from jax.experimental import pallas as pl
from jax.experimental.pallas import tpu as pltpu


# ----------------------------------------------------------------------------
# Helpers
# ----------------------------------------------------------------------------
def _round_up(x, m):
    return ((x + m - 1) // m) * m


def _vmem_limit_bytes():
    """Generation-aware VMEM budget: ~75% of physical capacity
    (~96 MiB on v5e/v6e's 128 MiB, ~48 MiB on v7x's 64 MiB)."""
    try:
        cap = int(pltpu.get_tpu_info().vmem_capacity_bytes)
    except Exception:
        cap = 64 * 1024 * 1024          # conservative (v7x-sized) fallback
    return (cap * 3) // 4


def _choose_tiles(T, H, V, vmem_limit):
    """tile_t fills the MXU M dimension (<=128 rows); tile_v is a 256-aligned
    lane-dense vocab tile sized to the VMEM budget (double-buffered W_out tile
    + hidden tile + resident output blocks, with headroom)."""
    tile_t = min(_round_up(T, 8), 128)
    tile_v = min(_round_up(V, 256), 4096)

    def footprint(tt, tv):
        w_out = 2 * H * tv * 2            # double-buffered bf16 W_out tile
        b_out = 2 * tv * 4
        hs_in = 2 * tt * H * 2            # double-buffered bf16 hidden tile
        out_b = 2 * tt * tv * 4 + 2 * tt * 4
        scr = 4 * tt * 4
        return int((w_out + b_out + hs_in + out_b + scr) * 1.25)

    while footprint(tile_t, tile_v) > vmem_limit and tile_v > 256:
        tile_v = max(256, _round_up(tile_v // 2, 256))
    while footprint(tile_t, tile_v) > vmem_limit and tile_t > 8:
        tile_t = max(8, _round_up(tile_t // 2, 8))
    return tile_t, tile_v


# ----------------------------------------------------------------------------
# Phase 1: sequential GRU recurrence (everything VMEM resident, loaded once)
# ----------------------------------------------------------------------------
def _gru_recurrence_kernel(emb_ref,   # (T, H)    bf16  gathered embedding rows
                           h0_ref,    # (1, H)    f32   initial hidden state
                           wih_ref,   # (H, 3H)   bf16  W_ih^T
                           whh_ref,   # (H, 3H)   bf16  W_hh^T
                           bih_ref,   # (1, 3H)   f32
                           bhh_ref,   # (1, 3H)   f32
                           hs_ref,    # out (T_pad, H) f32  per-step hidden states
                           gi_ref,    # scratch (T, 3H) f32
                           h_scr):    # scratch (1, H)  f32
    H = h0_ref.shape[-1]
    T = emb_ref.shape[0]

    hs_ref[...] = jnp.zeros_like(hs_ref)          # zero the padded rows
    h_scr[...] = h0_ref[...]

    # relu(embedding) and the input-side gate pre-activations for ALL steps in
    # one (T, H) @ (H, 3H) GEMM: fills the MXU M dimension, leaves only the
    # W_hh matvec inside the sequential loop.
    gi_ref[...] = jnp.dot(jnp.maximum(emb_ref[...], 0), wih_ref[...],
                          preferred_element_type=jnp.float32) + bih_ref[...]

    @pl.loop(0, T)
    def _(t):
        h = h_scr[...]                                            # (1, H) f32
        gi = gi_ref[pl.ds(t, 1), :]                               # (1, 3H) f32
        gh = jnp.dot(h.astype(jnp.bfloat16), whh_ref[...],
                     preferred_element_type=jnp.float32) + bhh_ref[...]
        # PyTorch GRU gate order: r, z, n
        r = jax.nn.sigmoid(gi[:, 0:H] + gh[:, 0:H])
        z = jax.nn.sigmoid(gi[:, H:2 * H] + gh[:, H:2 * H])
        n = jnp.tanh(gi[:, 2 * H:3 * H] + r * gh[:, 2 * H:3 * H])
        h_new = (1.0 - z) * n + z * h                             # f32 carry
        h_scr[...] = h_new
        hs_ref[pl.ds(t, 1), :] = h_new


# ----------------------------------------------------------------------------
# Phase 2: vocab projection GEMM + online log-sum-exp over vocab tiles
# ----------------------------------------------------------------------------
def _vocab_projection_kernel(hs_ref,      # (tile_t, H)   bf16
                             wout_ref,    # (H, tile_v)   bf16  streamed per tile
                             bout_ref,    # (1, tile_v)   f32
                             logits_ref,  # out (tile_t, tile_v) f32  lane-dense
                             logz_ref,    # out (tile_t, 1) f32  resident over j
                             m_scr,       # scratch (tile_t, 1) f32
                             s_scr):      # scratch (tile_t, 1) f32
    j = pl.program_id(1)

    @pl.when(j == 0)
    def _():
        m_scr[...] = jnp.full(m_scr.shape, -jnp.inf, dtype=m_scr.dtype)
        s_scr[...] = jnp.zeros_like(s_scr)

    logits = jnp.dot(hs_ref[...], wout_ref[...],
                     preferred_element_type=jnp.float32) + bout_ref[...]
    logits_ref[...] = logits                       # full (tile_t, tile_v) store

    # Online log-sum-exp across vocab tiles (flash-attention style).
    m_prev = m_scr[...]
    m_new = jnp.maximum(m_prev, jnp.max(logits, axis=-1, keepdims=True))
    s_scr[...] = (s_scr[...] * jnp.exp(m_prev - m_new)
                  + jnp.sum(jnp.exp(logits - m_new), axis=-1, keepdims=True))
    m_scr[...] = m_new

    @pl.when(j == pl.num_programs(1) - 1)
    def _():
        logz_ref[...] = m_scr[...] + jnp.log(s_scr[...])


# ----------------------------------------------------------------------------
# Wrappers
# ----------------------------------------------------------------------------
def decoder_rnn_decode(tokens, hidden, params, *, tile_t=None, tile_v=None):
    """Run T teacher-forced DecoderRNN steps.

    tokens: int32 (T,);  hidden: f32 (1, 1, H).
    Returns (log_probs (T, V) f32, final hidden (1, 1, H) f32).
    """
    emb = params["embedding"]                      # (V, H) bf16
    V, H = emb.shape
    T = int(tokens.shape[0])

    vmem_limit = _vmem_limit_bytes()
    auto_tt, auto_tv = _choose_tiles(T, H, V, vmem_limit)
    tt = int(tile_t) if tile_t is not None else auto_tt
    tv = int(tile_v) if tile_v is not None else auto_tv
    assert tt % 8 == 0 and tv % 128 == 0
    T_pad, V_pad = _round_up(T, tt), _round_up(V, tv)
    n_tt, n_vt = T_pad // tt, V_pad // tv

    # Gather all embedding rows up front: one contiguous, prefetchable (T, H)
    # block instead of T tiny data-dependent row DMAs.
    tok = tokens.astype(jnp.int32)
    emb_rows = jnp.take(emb, tok, axis=0)          # (T, H) bf16
    h0 = hidden.reshape(1, H).astype(jnp.float32)

    # ---------------- Phase 1: GRU recurrence ----------------
    gru_cost = pl.CostEstimate(
        flops=int(12 * T * H * H + 10 * T * H),
        transcendentals=int(3 * T * H),
        bytes_accessed=int(2 * 3 * H * H * 2 + T * H * 2 + 6 * H * 4
                           + H * 4 + T_pad * H * 4),
    )
    hs_f32 = pl.pallas_call(
        _gru_recurrence_kernel,
        out_shape=jax.ShapeDtypeStruct((T_pad, H), jnp.float32),
        scratch_shapes=[pltpu.VMEM((T, 3 * H), jnp.float32),
                        pltpu.VMEM((1, H), jnp.float32)],
        compiler_params=pltpu.CompilerParams(vmem_limit_bytes=vmem_limit),
        cost_estimate=gru_cost,
    )(emb_rows, h0, params["w_ih_t"], params["w_hh_t"],
      params["b_ih"], params["b_hh"])

    h_final = hs_f32[T - 1].reshape(1, 1, H)       # exact f32 recurrence value
    hs_bf16 = hs_f32.astype(jnp.bfloat16)          # GEMM input dtype, cast once

    # ---------------- Phase 2: output projection + log-softmax stats --------
    wout_t, bout = params["w_out_t"], params["b_out"]  # (H, V) bf16, (1, V) f32
    if V_pad != V:
        wout_t = jnp.pad(wout_t, ((0, 0), (0, V_pad - V)))
        bout = jnp.pad(bout, ((0, 0), (0, V_pad - V)), constant_values=-1e30)

    grid_spec = pltpu.PrefetchScalarGridSpec(
        num_scalar_prefetch=0,
        grid=(n_tt, n_vt),
        in_specs=[
            pl.BlockSpec((tt, H), lambda i, j: (i, 0)),    # hidden-state tile
            pl.BlockSpec((H, tv), lambda i, j: (0, j)),    # W_out^T tile (streamed
                                                           #  once per T-tile)
            pl.BlockSpec((1, tv), lambda i, j: (0, j)),    # b_out tile
        ],
        out_specs=[
            pl.BlockSpec((tt, tv), lambda i, j: (i, j)),   # raw logits, lane-dense
            pl.BlockSpec((tt, 1), lambda i, j: (i, 0)),    # logZ per row (resident)
        ],
        scratch_shapes=[pltpu.VMEM((tt, 1), jnp.float32),
                        pltpu.VMEM((tt, 1), jnp.float32)],
    )
    proj_cost = pl.CostEstimate(
        flops=int(2 * T_pad * H * V_pad),
        transcendentals=int(T_pad * V_pad),
        bytes_accessed=int(n_tt * H * V_pad * 2 + T_pad * H * 2 + V_pad * 4
                           + T_pad * V_pad * 4 + T_pad * 4),
    )
    logits, logz = pl.pallas_call(
        _vocab_projection_kernel,
        grid_spec=grid_spec,
        out_shape=(jax.ShapeDtypeStruct((T_pad, V_pad), jnp.float32),
                   jax.ShapeDtypeStruct((T_pad, 1), jnp.float32)),
        compiler_params=pltpu.CompilerParams(
            # T-tile axis is independent -> "parallel" uses v7x's 2nd TensorCore;
            # vocab axis carries the resident logZ -> "arbitrary".
            dimension_semantics=("parallel", "arbitrary"),
            vmem_limit_bytes=vmem_limit),
        cost_estimate=proj_cost,
    )(hs_bf16, wout_t, bout)

    # log_softmax = logits - logZ (single fused XLA elementwise op on the slice).
    log_probs = logits[:T, :V] - logz[:T]
    return log_probs, h_final


def decoder_rnn_forward(token, hidden, params, **kw):
    """Exact DecoderRNN.forward semantics: one token, one GRU step.
    Returns (log_probs (1, V), new_hidden (1, 1, H))."""
    tok = jnp.asarray(token, jnp.int32).reshape(1)
    return decoder_rnn_decode(tok, hidden, params, **kw)


# ----------------------------------------------------------------------------
# Parameter setup + pure-JAX reference
# ----------------------------------------------------------------------------
def init_params(key, hidden_size, output_size):
    H, V = hidden_size, output_size
    ks = jax.random.split(key, 7)
    s = 1.0 / jnp.sqrt(H)
    return {
        "embedding": jax.random.normal(ks[0], (V, H), jnp.float32),
        "w_ih": jax.random.uniform(ks[1], (3 * H, H), jnp.float32, -s, s),
        "w_hh": jax.random.uniform(ks[2], (3 * H, H), jnp.float32, -s, s),
        "b_ih": jax.random.uniform(ks[3], (3 * H,), jnp.float32, -s, s),
        "b_hh": jax.random.uniform(ks[4], (3 * H,), jnp.float32, -s, s),
        "w_out": jax.random.uniform(ks[5], (V, H), jnp.float32, -s, s),
        "b_out": jax.random.uniform(ks[6], (V,), jnp.float32, -s, s),
    }


def prepare_params(p):
    """Pre-transpose weights and cast the big matrices to bf16 once so every
    in-kernel matmul is a plain (M,K)@(K,N) bf16 MXU dot with f32 accumulation."""
    H = p["w_ih"].shape[1]
    V = p["w_out"].shape[0]
    return {
        "embedding": p["embedding"].astype(jnp.bfloat16),      # (V, H)
        "w_ih_t": p["w_ih"].T.astype(jnp.bfloat16),            # (H, 3H)
        "w_hh_t": p["w_hh"].T.astype(jnp.bfloat16),            # (H, 3H)
        "b_ih": p["b_ih"].reshape(1, 3 * H).astype(jnp.float32),
        "b_hh": p["b_hh"].reshape(1, 3 * H).astype(jnp.float32),
        "w_out_t": p["w_out"].T.astype(jnp.bfloat16),          # (H, V)
        "b_out": p["b_out"].reshape(1, V).astype(jnp.float32),
    }


def _bf16_dot(a, b):
    return jnp.dot(a.astype(jnp.bfloat16), b, preferred_element_type=jnp.float32)


def decoder_ref(tokens, hidden, kp):
    """Pure-JAX reference using the same bf16 weights / f32 accumulation."""
    H = kp["w_ih_t"].shape[0]
    emb = kp["embedding"]
    h = hidden.reshape(1, H).astype(jnp.float32)
    rows = []
    for t in range(int(tokens.shape[0])):
        x = jnp.maximum(emb[tokens[t]], 0).reshape(1, H)
        gi = _bf16_dot(x, kp["w_ih_t"]) + kp["b_ih"]
        gh = _bf16_dot(h, kp["w_hh_t"]) + kp["b_hh"]
        r = jax.nn.sigmoid(gi[:, :H] + gh[:, :H])
        z = jax.nn.sigmoid(gi[:, H:2 * H] + gh[:, H:2 * H])
        n = jnp.tanh(gi[:, 2 * H:] + r * gh[:, 2 * H:])
        h = (1.0 - z) * n + z * h
        logits = _bf16_dot(h, kp["w_out_t"]) + kp["b_out"]
        rows.append(jax.nn.log_softmax(logits, axis=-1))
    return jnp.concatenate(rows, axis=0), h.reshape(1, 1, H)


# ----------------------------------------------------------------------------
if __name__ == "__main__":
    # V not a multiple of 256 and T not a multiple of 8, to exercise padding.
    HIDDEN, VOCAB, STEPS = 128, 320, 10

    key = jax.random.PRNGKey(0)
    pkey, hkey, tkey = jax.random.split(key, 3)

    raw = init_params(pkey, HIDDEN, VOCAB)
    params = prepare_params(raw)
    hidden0 = jax.random.normal(hkey, (1, 1, HIDDEN), jnp.float32)
    tokens = jax.random.randint(tkey, (STEPS,), 0, VOCAB, jnp.int32)

    # Single step == the PyTorch module's forward().
    logp1, h1 = decoder_rnn_forward(tokens[:1], hidden0, params)
    # Multi-step decode, auto tiling (single padded vocab tile).
    logps, hT = decoder_rnn_decode(tokens, hidden0, params)
    # Multi-step decode, forced multi-tile path (2 T-tiles x 2 vocab tiles).
    logps_mt, hT_mt = decoder_rnn_decode(tokens, hidden0, params,
                                         tile_t=8, tile_v=256)
    jax.block_until_ready((logp1, h1, logps, hT, logps_mt, hT_mt))

    ref_lp1, ref_h1 = decoder_ref(tokens[:1], hidden0, params)
    ref_lps, ref_hT = decoder_ref(tokens, hidden0, params)

    assert logp1.shape == (1, VOCAB) and h1.shape == (1, 1, HIDDEN)
    assert logps.shape == (STEPS, VOCAB) and hT.shape == (1, 1, HIDDEN)
    # log-softmax rows must sum to ~1 in probability space
    assert bool(jnp.all(jnp.abs(jnp.sum(jnp.exp(logps), axis=-1) - 1.0) < 1e-3))
    assert bool(jnp.allclose(logp1, ref_lp1, atol=2e-2))
    assert bool(jnp.allclose(h1, ref_h1, atol=2e-2))
    assert bool(jnp.allclose(logps, ref_lps, atol=2e-2))
    assert bool(jnp.allclose(hT, ref_hT, atol=2e-2))
    # Tiling must not change the result.
    assert bool(jnp.allclose(logps_mt, logps, atol=1e-4))
    assert bool(jnp.allclose(hT_mt, hT, atol=1e-4))

    print("KERNEL_OK")
</pallas_src>

<mosaic_0001>
module attributes {stable_mosaic.version = 11 : i64} {
  func.func @_gru_recurrence_kernel(%arg0: memref<1x128xbf16, #tpu.memory_space<vmem>>, %arg1: memref<1x128xf32, #tpu.memory_space<vmem>>, %arg2: memref<128x384xbf16, #tpu.memory_space<vmem>>, %arg3: memref<128x384xbf16, #tpu.memory_space<vmem>>, %arg4: memref<1x384xf32, #tpu.memory_space<vmem>>, %arg5: memref<1x384xf32, #tpu.memory_space<vmem>>, %arg6: memref<8x128xf32, #tpu.memory_space<vmem>>, %arg7: memref<1x384xf32, #tpu.memory_space<vmem>>, %arg8: memref<1x128xf32, #tpu.memory_space<vmem>>) attributes {dimension_semantics = [], scalar_prefetch = 0 : i64, scratch_operands = 2 : i64, tpu.core_type = #tpu.core_type<tc>} {
    %cst = arith.constant 0.000000e+00 : f32
    %0 = vector.broadcast %cst : f32 to vector<8x128xf32>
    %c0 = arith.constant 0 : index
    %c0_0 = arith.constant 0 : index
    %1 = vector.load %arg6[%c0, %c0_0] : memref<8x128xf32, #tpu.memory_space<vmem>>, vector<8x128xf32>
    tpu.vector_store %arg6[%c0, %c0_0], %0 {strides = array<i32>} : memref<8x128xf32, #tpu.memory_space<vmem>>, vector<8x128xf32>,
    %c0_1 = arith.constant 0 : index
    %c0_2 = arith.constant 0 : index
    %2 = vector.load %arg1[%c0_1, %c0_2] : memref<1x128xf32, #tpu.memory_space<vmem>>, vector<1x128xf32>
    %c0_3 = arith.constant 0 : index
    %c0_4 = arith.constant 0 : index
    %3 = vector.load %arg8[%c0_3, %c0_4] : memref<1x128xf32, #tpu.memory_space<vmem>>, vector<1x128xf32>
    tpu.vector_store %arg8[%c0_3, %c0_4], %2 {strides = array<i32>} : memref<1x128xf32, #tpu.memory_space<vmem>>, vector<1x128xf32>,
    %c0_5 = arith.constant 0 : index
    %c0_6 = arith.constant 0 : index
    %4 = vector.load %arg0[%c0_5, %c0_6] : memref<1x128xbf16, #tpu.memory_space<vmem>>, vector<1x128xbf16>
    %cst_7 = arith.constant 0.000000e+00 : bf16
    %5 = vector.broadcast %cst_7 : bf16 to vector<1x128xbf16>
    %6 = arith.maximumf %4, %5 : vector<1x128xbf16>
    %c0_8 = arith.constant 0 : index
    %c0_9 = arith.constant 0 : index
    %7 = vector.load %arg2[%c0_8, %c0_9] : memref<128x384xbf16, #tpu.memory_space<vmem>>, vector<128x384xbf16>
    %cst_10 = arith.constant dense<0.000000e+00> : vector<1x384xf32>
    %8 = tpu.matmul %6, %7, %cst_10 {dimension_numbers = #tpu.dot_dimension_numbers<[1], [0], [0], [1], [0, 0, 1, 1], [], []>} : vector<1x128xbf16>, vector<128x384xbf16>, vector<1x384xf32> -> vector<1x384xf32>
    %c0_11 = arith.constant 0 : index
    %c0_12 = arith.constant 0 : index
    %9 = vector.load %arg4[%c0_11, %c0_12] : memref<1x384xf32, #tpu.memory_space<vmem>>, vector<1x384xf32>
    %10 = arith.addf %8, %9 : vector<1x384xf32>
    %c0_13 = arith.constant 0 : index
    %c0_14 = arith.constant 0 : index
    %11 = vector.load %arg7[%c0_13, %c0_14] : memref<1x384xf32, #tpu.memory_space<vmem>>, vector<1x384xf32>
    tpu.vector_store %arg7[%c0_13, %c0_14], %10 {strides = array<i32>} : memref<1x384xf32, #tpu.memory_space<vmem>>, vector<1x384xf32>,
    %c0_i32 = arith.constant 0 : i32
    %c1_i32 = arith.constant 1 : i32
    %12 = arith.muli %c0_i32, %c1_i32 : i32
    %c0_i32_15 = arith.constant 0 : i32
    %13 = arith.addi %c0_i32_15, %12 : i32
    %c0_16 = arith.constant 0 : index
    %c0_17 = arith.constant 0 : index
    %14 = vector.load %arg8[%c0_16, %c0_17] : memref<1x128xf32, #tpu.memory_space<vmem>>, vector<1x128xf32>
    %15 = arith.index_cast %13 : i32 to index
    %c0_18 = arith.constant 0 : index
    %16 = vector.load %arg7[%15, %c0_18] : memref<1x384xf32, #tpu.memory_space<vmem>>, vector<1x384xf32>
    %17 = arith.truncf %14 : vector<1x128xf32> to vector<1x128xbf16>
    %c0_19 = arith.constant 0 : index
    %c0_20 = arith.constant 0 : index
    %18 = vector.load %arg3[%c0_19, %c0_20] : memref<128x384xbf16, #tpu.memory_space<vmem>>, vector<128x384xbf16>
    %cst_21 = arith.constant dense<0.000000e+00> : vector<1x384xf32>
    %19 = tpu.matmul %17, %18, %cst_21 {dimension_numbers = #tpu.dot_dimension_numbers<[1], [0], [0], [1], [0, 0, 1, 1], [], []>} : vector<1x128xbf16>, vector<128x384xbf16>, vector<1x384xf32> -> vector<1x384xf32>
    %c0_22 = arith.constant 0 : index
    %c0_23 = arith.constant 0 : index
    %20 = vector.load %arg5[%c0_22, %c0_23] : memref<1x384xf32, #tpu.memory_space<vmem>>, vector<1x384xf32>
    %21 = arith.addf %19, %20 : vector<1x384xf32>
    %22 = vector.extract_strided_slice %16 {offsets = [0, 0], sizes = [1, 128], strides = [1, 1]} : vector<1x384xf32> to vector<1x128xf32>
    %23 = vector.extract_strided_slice %21 {offsets = [0, 0], sizes = [1, 128], strides = [1, 1]} : vector<1x384xf32> to vector<1x128xf32>
    %24 = arith.addf %22, %23 : vector<1x128xf32>
    %25 = arith.negf %24 : vector<1x128xf32>
    %26 = math.exp %25 : vector<1x128xf32>
    %cst_24 = arith.constant 1.000000e+00 : f32
    %27 = vector.broadcast %cst_24 : f32 to vector<1x128xf32>
    %28 = arith.addf %27, %26 : vector<1x128xf32>
    %29 = arith.divf %27, %28 : vector<1x128xf32>
    %30 = vector.extract_strided_slice %16 {offsets = [0, 128], sizes = [1, 128], strides = [1, 1]} : vector<1x384xf32> to vector<1x128xf32>
    %31 = vector.extract_strided_slice %21 {offsets = [0, 128], sizes = [1, 128], strides = [1, 1]} : vector<1x384xf32> to vector<1x128xf32>
    %32 = arith.addf %30, %31 : vector<1x128xf32>
    %33 = arith.negf %32 : vector<1x128xf32>
    %34 = math.exp %33 : vector<1x128xf32>
    %cst_25 = arith.constant 1.000000e+00 : f32
    %35 = vector.broadcast %cst_25 : f32 to vector<1x128xf32>
    %36 = arith.addf %35, %34 : vector<1x128xf32>
    %37 = arith.divf %35, %36 : vector<1x128xf32>
    %38 = vector.extract_strided_slice %16 {offsets = [0, 256], sizes = [1, 128], strides = [1, 1]} : vector<1x384xf32> to vector<1x128xf32>
    %39 = vector.extract_strided_slice %21 {offsets = [0, 256], sizes = [1, 128], strides = [1, 1]} : vector<1x384xf32> to vector<1x128xf32>
    %40 = arith.mulf %29, %39 : vector<1x128xf32>
    %41 = arith.addf %38, %40 : vector<1x128xf32>
    %42 = math.tanh %41 : vector<1x128xf32>
    %cst_26 = arith.constant 1.000000e+00 : f32
    %43 = vector.broadcast %cst_26 : f32 to vector<1x128xf32>
    %44 = arith.subf %43, %37 : vector<1x128xf32>
    %45 = arith.mulf %44, %42 : vector<1x128xf32>
    %46 = arith.mulf %37, %14 : vector<1x128xf32>
    %47 = arith.addf %45, %46 : vector<1x128xf32>
    %c0_27 = arith.constant 0 : index
    %c0_28 = arith.constant 0 : index
    %48 = vector.load %arg8[%c0_27, %c0_28] : memref<1x128xf32, #tpu.memory_space<vmem>>, vector<1x128xf32>
    tpu.vector_store %arg8[%c0_27, %c0_28], %47 {strides = array<i32>} : memref<1x128xf32, #tpu.memory_space<vmem>>, vector<1x128xf32>,
    %49 = arith.index_cast %13 : i32 to index
    %c0_29 = arith.constant 0 : index
    %50 = vector.load %arg6[%49, %c0_29] : memref<8x128xf32, #tpu.memory_space<vmem>>, vector<1x128xf32>
    tpu.vector_store %arg6[%49, %c0_29], %47 {strides = array<i32>} : memref<8x128xf32, #tpu.memory_space<vmem>>, vector<1x128xf32>,
    %c1_i32_30 = arith.constant 1 : i32
    return
  }
}

</mosaic_0001>

<llo_original>
// kernel: tpu_custom_call.1
$region0: #{tpu_custom_call.1}
  #allocation0 [shape = 'u32[]', space=smem, size = 0x4, offset = 0x4, fixed_abs, tag = 'smem constant byte address 0x4 - core index']
  #allocation1 [shape = 'u32[144,128]{1,0:T(1,128)}', space=vmem, size = 0x12000, scoped, tag = 'internal scratch']
  #allocation2 [shape = 'f32[1,384]{1,0:T(1,128)}', space=vmem, size = 0x600, scoped, tag = 'scratch operand']
  #allocation3 [shape = 'f32[1,128]{1,0:T(1,128)}', space=vmem, size = 0x200, scoped, tag = 'scratch operand']
  %s0 = inlined_call_operand.hbm [shape: bf16[1,128], index: 0, kind: input, shape index: {}]
  %s1 = inlined_call_operand.vmem [shape: f32[1,128], index: 1, kind: input, shape index: {}]
  %s2 = inlined_call_operand.hbm [shape: bf16[128,384], index: 2, kind: input, shape index: {}]
  %s3 = inlined_call_operand.hbm [shape: bf16[128,384], index: 3, kind: input, shape index: {}]
  %s4 = inlined_call_operand.vmem [shape: f32[1,384], index: 4, kind: input, shape index: {}]
  %s5 = inlined_call_operand.vmem [shape: f32[1,384], index: 5, kind: input, shape index: {}]
  %s6 = inlined_call_operand.hbm [shape: f32[8,128], index: 6, kind: output, shape index: {}]
  %s7 = sld [smem:[#allocation0]]
  $region46: #{tpu_custom_call.1} parent=0
    _
  %s9 = ssub.s32 1, %s7
  %s10 = scalar_select 0, %s9, %s7
  $region1: #{tpu_custom_call.1} parent=0
    #allocation4 [shape = 'u8[512]{0}', space=vmem, size = 0x400, scoped, tag = 'input window, operand 0, single buffered']
    #allocation5 [shape = 's32[1]{0}', space=sflag, size = 0x4, scoped, tag = 'scoped memory for tpu_custom_call.1']
    #allocation6 [shape = 's32[1]{0}', space=sflag, size = 0x4, scoped, tag = 'scoped memory for tpu_custom_call.1']
    #allocation7 [shape = 'u8[98304]{0}', space=vmem, size = 0x18000, scoped, tag = 'input window, operand 2, single buffered']
    #allocation8 [shape = 's32[1]{0}', space=sflag, size = 0x4, scoped, tag = 'scoped memory for tpu_custom_call.1']
    #allocation9 [shape = 'u8[98304]{0}', space=vmem, size = 0x18000, scoped, tag = 'input window, operand 3, single buffered']
    #allocation10 [shape = 'u8[4096]{0}', space=vmem, size = 0x1000, scoped, tag = 'output window, operand 0, single buffered']
    %11 = vsyncpa [#allocation5], 0
    %12 = vsyncpa [#allocation8], 0
    %13 = vsyncpa [#allocation6], 0
    // Predicated region
    $region2: #{tpu_custom_call.1} parent=1 // pred_check
      _
    $region3: #{tpu_custom_call.1} parent=1 // pred_check_branch
      %15 = sbr.rel (0) target = $region5
    $region4: #{tpu_custom_call.1} parent=1 // pred_region
      %s17 = ssub.s32 16, 16
      %18 = vsyncadd [#allocation5], %s17
      %s20 = sshll.u32 [#allocation4], 4
      %s21 = int_to_ptr.vmem [resolvable:$true] %s20
      %23 = dma.hbm_to_vmem [thread:$0]  %s0, 16, %s21, [#allocation5]
    $region5: #{tpu_custom_call.1} parent=1 // pred_fallthru
      _
    // Predicated region
    $region6: #{tpu_custom_call.1} parent=1 // pred_check
      _
    $region7: #{tpu_custom_call.1} parent=1 // pred_check_branch
      %25 = sbr.rel (0) target = $region9
    $region8: #{tpu_custom_call.1} parent=1 // pred_region
      _
    $region9: #{tpu_custom_call.1} parent=1 // pred_fallthru
      _
    // Predicated region
    $region10: #{tpu_custom_call.1} parent=1 // pred_check
      _
    $region11: #{tpu_custom_call.1} parent=1 // pred_check_branch
      %27 = sbr.rel (0) target = $region13
    $region12: #{tpu_custom_call.1} parent=1 // pred_region
      %s29 = ssub.s32 3072, 3072
      %30 = vsyncadd [#allocation8], %s29
      %s31 = sshll.u32 [#allocation7], 4
      %s32 = int_to_ptr.vmem [resolvable:$true] %s31
      %37 = dma.hbm_to_vmem [thread:$0]  %s2, 3072, %s32, [#allocation8], 192, 192, 12
    $region13: #{tpu_custom_call.1} parent=1 // pred_fallthru
      _
    // Predicated region
    $region14: #{tpu_custom_call.1} parent=1 // pred_check
      _
    $region15: #{tpu_custom_call.1} parent=1 // pred_check_branch
      %39 = sbr.rel (0) target = $region17
    $region16: #{tpu_custom_call.1} parent=1 // pred_region
      %s41 = ssub.s32 3072, 3072
      %42 = vsyncadd [#allocation8], %s41
      %s43 = sshll.u32 [#allocation9], 4
      %s44 = int_to_ptr.vmem [resolvable:$true] %s43
      %49 = dma.hbm_to_vmem [thread:$0]  %s3, 3072, %s44, [#allocation8], 192, 192, 12
    $region17: #{tpu_custom_call.1} parent=1 // pred_fallthru
      _
    // Predicated region
    $region18: #{tpu_custom_call.1} parent=1 // pred_check
      _
    $region19: #{tpu_custom_call.1} parent=1 // pred_check_branch
      %51 = sbr.rel (0) target = $region21
    $region20: #{tpu_custom_call.1} parent=1 // pred_region
      _
    $region21: #{tpu_custom_call.1} parent=1 // pred_fallthru
      _
    // Predicated region
    $region22: #{tpu_custom_call.1} parent=1 // pred_check
      _
    $region23: #{tpu_custom_call.1} parent=1 // pred_check_branch
      %53 = sbr.rel (0) target = $region25
    $region24: #{tpu_custom_call.1} parent=1 // pred_region
      _
    $region25: #{tpu_custom_call.1} parent=1 // pred_fallthru
      _
    // Predicated region
    $region26: #{tpu_custom_call.1} parent=1 // pred_check
      _
    $region27: #{tpu_custom_call.1} parent=1 // pred_check_branch
      %55 = sbr.rel (0) target = $region29
    $region28: #{tpu_custom_call.1} parent=1 // pred_region
      %56 = dma.done [#allocation5], 16
    $region29: #{tpu_custom_call.1} parent=1 // pred_fallthru
      _
    // Predicated region
    $region30: #{tpu_custom_call.1} parent=1 // pred_check
      _
    $region31: #{tpu_custom_call.1} parent=1 // pred_check_branch
      %58 = sbr.rel (0) target = $region33
    $region32: #{tpu_custom_call.1} parent=1 // pred_region
      %59 = dma.done [#allocation8], 3072
    $region33: #{tpu_custom_call.1} parent=1 // pred_fallthru
      _
    // Predicated region
    $region34: #{tpu_custom_call.1} parent=1 // pred_check
      _
    $region35: #{tpu_custom_call.1} parent=1 // pred_check_branch
      %61 = sbr.rel (0) target = $region37
    $region36: #{tpu_custom_call.1} parent=1 // pred_region
      %62 = dma.done [#allocation8], 3072
    $region37: #{tpu_custom_call.1} parent=1 // pred_fallthru
      _
    %64 = vst [vmem:[#allocation10] sm:$0xff] 0.0
    %v65 = vld [vmem:[%s1] sm:$0x1]
    %66 = vst [vmem:[#allocation3] sm:$0x1] %v65
    %v67 = vld [vmem:[#allocation4] sm:$0x1]
    %v68 = vmax.bf16 %v67, 0
    %v69 = vld [vmem:[#allocation7] sm:$0xff]
    %v70 = vld [vmem:[#allocation7 + $0x8] sm:$0xf]
    %v71 = vld [vmem:[#allocation7 + $0xc] sm:$0xff]
    %v72 = vld [vmem:[#allocation7 + $0x14] sm:$0xf]
    %v73 = vld [vmem:[#allocation7 + $0x18] sm:$0xff]
    %v74 = vld [vmem:[#allocation7 + $0x20] sm:$0xf]
    %v75 = vld [vmem:[#allocation7 + $0x24] sm:$0xff]
    %v76 = vld [vmem:[#allocation7 + $0x2c] sm:$0xf]
    %v77 = vld [vmem:[#allocation7 + $0x30] sm:$0xff]
    %v78 = vld [vmem:[#allocation7 + $0x38] sm:$0xf]
    %v79 = vld [vmem:[#allocation7 + $0x3c] sm:$0xff]
    %v80 = vld [vmem:[#allocation7 + $0x44] sm:$0xf]
    %v81 = vld [vmem:[#allocation7 + $0x48] sm:$0xff]
    %v82 = vld [vmem:[#allocation7 + $0x50] sm:$0xf]
    %v83 = vld [vmem:[#allocation7 + $0x54] sm:$0xff]
    %v84 = vld [vmem:[#allocation7 + $0x5c] sm:$0xf]
    %v85 = vld [vmem:[#allocation7 + $0x60] sm:$0xff]
    %v86 = vld [vmem:[#allocation7 + $0x68] sm:$0xf]
    %v87 = vld [vmem:[#allocation7 + $0x6c] sm:$0xff]
    %v88 = vld [vmem:[#allocation7 + $0x74] sm:$0xf]
    %v89 = vld [vmem:[#allocation7 + $0x78] sm:$0xff]
    %v90 = vld [vmem:[#allocation7 + $0x80] sm:$0xf]
    %v91 = vld [vmem:[#allocation7 + $0x84] sm:$0xff]
    %v92 = vld [vmem:[#allocation7 + $0x8c] sm:$0xf]
    %v93 = vld [vmem:[#allocation7 + $0x90] sm:$0xff]
    %v94 = vld [vmem:[#allocation7 + $0x98] sm:$0xf]
    %v95 = vld [vmem:[#allocation7 + $0x9c] sm:$0xff]
    %v96 = vld [vmem:[#allocation7 + $0xa4] sm:$0xf]
    %v97 = vld [vmem:[#allocation7 + $0xa8] sm:$0xff]
    %v98 = vld [vmem:[#allocation7 + $0xb0] sm:$0xf]
    %v99 = vld [vmem:[#allocation7 + $0xb4] sm:$0xff]
    %v100 = vld [vmem:[#allocation7 + $0xbc] sm:$0xf]
    %v101 = vld [vmem:[%s4] sm:$0x7]
    %v134 = vunpack.c.l.b16 %v69
    %v135 = vunpack.c.h.b16 %v69
    %v136 = vunpack.c.l.b16 %v70
    %v137 = vunpack.c.l.b16 %v71
    %v138 = vunpack.c.h.b16 %v71
    %v139 = vunpack.c.l.b16 %v72
    %v140 = vunpack.c.l.b16 %v73
    %v141 = vunpack.c.h.b16 %v73
    %v142 = vunpack.c.l.b16 %v74
    %v143 = vunpack.c.l.b16 %v75
    %v144 = vunpack.c.h.b16 %v75
    %v145 = vunpack.c.l.b16 %v76
    %v146 = vunpack.c.l.b16 %v77
    %v147 = vunpack.c.h.b16 %v77
    %v148 = vunpack.c.l.b16 %v78
    %v149 = vunpack.c.l.b16 %v79
    %v150 = vunpack.c.h.b16 %v79
    %v151 = vunpack.c.l.b16 %v80
    %v152 = vunpack.c.l.b16 %v81
    %v153 = vunpack.c.h.b16 %v81
    %v154 = vunpack.c.l.b16 %v82
    %v155 = vunpack.c.l.b16 %v83
    %v156 = vunpack.c.h.b16 %v83
    %v157 = vunpack.c.l.b16 %v84
    %v158 = vunpack.c.l.b16 %v85
    %v159 = vunpack.c.h.b16 %v85
    %v160 = vunpack.c.l.b16 %v86
    %v161 = vunpack.c.l.b16 %v87
    %v162 = vunpack.c.h.b16 %v87
    %v163 = vunpack.c.l.b16 %v88
    %v164 = vunpack.c.l.b16 %v89
    %v165 = vunpack.c.h.b16 %v89
    %v166 = vunpack.c.l.b16 %v90
    %v167 = vunpack.c.l.b16 %v91
    %v168 = vunpack.c.h.b16 %v91
    %v169 = vunpack.c.l.b16 %v92
    %v170 = vunpack.c.l.b16 %v93
    %v171 = vunpack.c.h.b16 %v93
    %v172 = vunpack.c.l.b16 %v94
    %v173 = vunpack.c.l.b16 %v95
    %v174 = vunpack.c.h.b16 %v95
    %v175 = vunpack.c.l.b16 %v96
    %v176 = vunpack.c.l.b16 %v97
    %v177 = vunpack.c.h.b16 %v97
    %v178 = vunpack.c.l.b16 %v98
    %v179 = vunpack.c.l.b16 %v99
    %v180 = vunpack.c.h.b16 %v99
    %v181 = vunpack.c.l.b16 %v100
    %v182 = vpack.c.b16 %v137, %v134
    %v183 = vpack.c.b16 %v138, %v135
    %v184 = vpack.c.b16 %v139, %v136
    %v185 = vpack.c.b16 %v143, %v140
    %v186 = vpack.c.b16 %v144, %v141
    %v187 = vpack.c.b16 %v145, %v142
    %v188 = vpack.c.b16 %v149, %v146
    %v189 = vpack.c.b16 %v150, %v147
    %v190 = vpack.c.b16 %v151, %v148
    %v191 = vpack.c.b16 %v155, %v152
    %v192 = vpack.c.b16 %v156, %v153
    %v193 = vpack.c.b16 %v157, %v154
    %v194 = vpack.c.b16 %v161, %v158
    %v195 = vpack.c.b16 %v162, %v159
    %v196 = vpack.c.b16 %v163, %v160
    %v197 = vpack.c.b16 %v167, %v164
    %v198 = vpack.c.b16 %v168, %v165
    %v199 = vpack.c.b16 %v169, %v166
    %v200 = vpack.c.b16 %v173, %v170
    %v201 = vpack.c.b16 %v174, %v171
    %v202 = vpack.c.b16 %v175, %v172
    %v203 = vpack.c.b16 %v179, %v176
    %v204 = vpack.c.b16 %v180, %v177
    %v205 = vpack.c.b16 %v181, %v178
    %v231 = vlaneseq
    %v232 = vshrl.u32 %v231, 7
    %v233 = vsub.s32 0, %v232
    %v234 = vrot.slane %v101, %v233
    %v235 = vlaneseq
    %v236 = vshrl.u32 %v235, 7
    %v237 = vsub.s32 1, %v236
    %v238 = vrot.slane %v101, %v237
    %v239 = vlaneseq
    %v240 = vshrl.u32 %v239, 7
    %v241 = vsub.s32 2, %v240
    %v242 = vrot.slane %v101, %v241
    %246 = vmatprep.subr.bf16.mxu0 %v183
    %247 = vmatpush1.bf16.msra.mxu0 %v182
    %248 = vmatprep.subr.bf16.mxu0 %v186
    %249 = vmatpush1.bf16.msra.mxu0 %v185
    %250 = vmatprep.subr.bf16.mxu0 %v189
    %251 = vmatpush1.bf16.msra.mxu0 %v188
    %252 = vmatprep.subr.bf16.mxu0 %v192
    %253 = vmatpush1.bf16.msra.mxu0 %v191
    %254 = vmatprep.subr.bf16.mxu0 %v195
    %255 = vmatpush1.bf16.msra.mxu0 %v194
    %256 = vmatprep.subr.bf16.mxu0 %v198
    %257 = vmatpush1.bf16.msra.mxu0 %v197
    %258 = vmatprep.subr.bf16.mxu0 %v201
    %259 = vmatpush1.bf16.msra.mxu0 %v200
    %260 = vmatprep.subr.bf16.mxu0 %v204
    %261 = vmatpush1.bf16.msra.mxu0 %v203
    %262 = vmatprep.subr.bf16.mxu0 0
    %263 = vmatpush1.bf16.msra.mxu0 0
    %264 = vmatprep.subr.bf16.mxu0 0
    %265 = vmatpush1.bf16.msra.mxu0 0
    %266 = vmatprep.subr.bf16.mxu0 0
    %267 = vmatpush1.bf16.msra.mxu0 0
    %268 = vmatprep.subr.bf16.mxu0 0
    %269 = vmatpush1.bf16.msra.mxu0 0
    %270 = vmatprep.subr.bf16.mxu0 0
    %271 = vmatpush1.bf16.msra.mxu0 0
    %272 = vmatprep.subr.bf16.mxu0 0
    %273 = vmatpush1.bf16.msra.mxu0 0
    %274 = vmatprep.subr.bf16.mxu0 0
    %275 = vmatpush1.bf16.msra.mxu0 0
    %276 = vmatprep.subr.bf16.mxu0 0
    %277 = vmatpush1.bf16.msra.mxu0 0
    %278 = vmatprep.mubr.bf16.mxu0 0
    %279 = vmatmul.mubr.bf16.gmra.mrb[0].mxu0 %v68
    %v280 = vpop.f32.mrb[0].mxu0
    %v281 = vadd.f32 %v234, %v280
    %v282 = vpop.f32.mrb[0].mxu0
    %v283 = vadd.f32 %v238, %v282
    %v284 = vpop.f32.mrb[0].mxu0
    %v285 = vpop.f32.mrb[0].mxu0
    %286 = vdwg.mxu0
    %287 = vmatprep.subr.bf16.mxu0 0
    %288 = vmatpush1.bf16.msra.mxu0 %v184
    %289 = vmatprep.subr.bf16.mxu0 0
    %290 = vmatpush1.bf16.msra.mxu0 %v187
    %291 = vmatprep.subr.bf16.mxu0 0
    %292 = vmatpush1.bf16.msra.mxu0 %v190
    %293 = vmatprep.subr.bf16.mxu0 0
    %294 = vmatpush1.bf16.msra.mxu0 %v193
    %295 = vmatprep.subr.bf16.mxu0 0
    %296 = vmatpush1.bf16.msra.mxu0 %v196
    %297 = vmatprep.subr.bf16.mxu0 0
    %298 = vmatpush1.bf16.msra.mxu0 %v199
    %299 = vmatprep.subr.bf16.mxu0 0
    %300 = vmatpush1.bf16.msra.mxu0 %v202
    %301 = vmatprep.subr.bf16.mxu0 0
    %302 = vmatpush1.bf16.msra.mxu0 %v205
    %303 = vmatprep.subr.bf16.mxu0 0
    %304 = vmatpush1.bf16.msra.mxu0 0
    %305 = vmatprep.subr.bf16.mxu0 0
    %306 = vmatpush1.bf16.msra.mxu0 0
    %307 = vmatprep.subr.bf16.mxu0 0
    %308 = vmatpush1.bf16.msra.mxu0 0
    %309 = vmatprep.subr.bf16.mxu0 0
    %310 = vmatpush1.bf16.msra.mxu0 0
    %311 = vmatprep.subr.bf16.mxu0 0
    %312 = vmatpush1.bf16.msra.mxu0 0
    %313 = vmatprep.subr.bf16.mxu0 0
    %314 = vmatpush1.bf16.msra.mxu0 0
    %315 = vmatprep.subr.bf16.mxu0 0
    %316 = vmatpush1.bf16.msra.mxu0 0
    %317 = vmatprep.subr.bf16.mxu0 0
    %318 = vmatpush1.bf16.msra.mxu0 0
    %319 = vmatprep.mubr.bf16.mxu0 0
    %320 = vmatmul.mubr.bf16.gmra.mrb[0].mxu0 %v68
    %v321 = vpop.f32.mrb[0].mxu0
    %v322 = vadd.f32 %v242, %v321
    %v323 = vpop.f32.mrb[0].mxu0
    %v324 = vpop.f32.mrb[0].mxu0
    %v325 = vpop.f32.mrb[0].mxu0
    %326 = vdwg.mxu0
    %v330 = vcombine.low %v281, %v283
    %v332 = vunpack.c.l.s4 1966171168
    %v333 = vunpack.c.0.s8 %v332
    %v334 = vlaneseq
    %v335 = vshrl.u32 %v334, 7
    %v336 = vsub.s32 %v333, %v335
    %v337 = vrot.slane %v330, %v336
    %v339 = vunpack.c.l.s4 1966171168
    %v340 = vunpack.c.0.s8 %v339
    %v341 = vlaneseq
    %v342 = vshrl.u32 %v341, 7
    %v343 = vsub.s32 %v340, %v342
    %v344 = vrot.slane %v322, %v343
    %v345 = vcombine.low %v337, %v344
    %v347 = vunpack.c.l.s4 1966171168
    %v348 = vunpack.c.0.s8 %v347
    %v349 = vlaneseq
    %v350 = vshrl.u32 %v349, 7
    %v351 = vsub.s32 %v348, %v350
    %v352 = vrot.slane %v345, %v351
    %v354 = vlaneseq
    %vm355 = vcmp.ge.s32.totalorder %v354, 0
    %vm356 = vcmp.lt.s32.totalorder %v354, 384
    %vm357 = vmand %vm355, %vm356
    %358 = vst.msk [vmem:[#allocation2] sm:$0x7] %vm357, %v352
    %v359 = vld [vmem:[#allocation3] sm:$0x1]
    %v360 = vld [vmem:[#allocation2] sm:$0x7]
    %v361 = vpack.c.bf16 %v359, %v359
    %v362 = vld [vmem:[#allocation9] sm:$0xff]
    %v363 = vld [vmem:[#allocation9 + $0x8] sm:$0xf]
    %v364 = vld [vmem:[#allocation9 + $0xc] sm:$0xff]
    %v365 = vld [vmem:[#allocation9 + $0x14] sm:$0xf]
    %v366 = vld [vmem:[#allocation9 + $0x18] sm:$0xff]
    %v367 = vld [vmem:[#allocation9 + $0x20] sm:$0xf]
    %v368 = vld [vmem:[#allocation9 + $0x24] sm:$0xff]
    %v369 = vld [vmem:[#allocation9 + $0x2c] sm:$0xf]
    %v370 = vld [vmem:[#allocation9 + $0x30] sm:$0xff]
    %v371 = vld [vmem:[#allocation9 + $0x38] sm:$0xf]
    %v372 = vld [vmem:[#allocation9 + $0x3c] sm:$0xff]
    %v373 = vld [vmem:[#allocation9 + $0x44] sm:$0xf]
    %v374 = vld [vmem:[#allocation9 + $0x48] sm:$0xff]
    %v375 = vld [vmem:[#allocation9 + $0x50] sm:$0xf]
    %v376 = vld [vmem:[#allocation9 + $0x54] sm:$0xff]
    %v377 = vld [vmem:[#allocation9 + $0x5c] sm:$0xf]
    %v378 = vld [vmem:[#allocation9 + $0x60] sm:$0xff]
    %v379 = vld [vmem:[#allocation9 + $0x68] sm:$0xf]
    %v380 = vld [vmem:[#allocation9 + $0x6c] sm:$0xff]
    %v381 = vld [vmem:[#allocation9 + $0x74] sm:$0xf]
    %v382 = vld [vmem:[#allocation9 + $0x78] sm:$0xff]
    %v383 = vld [vmem:[#allocation9 + $0x80] sm:$0xf]
    %v384 = vld [vmem:[#allocation9 + $0x84] sm:$0xff]
    %v385 = vld [vmem:[#allocation9 + $0x8c] sm:$0xf]
    %v386 = vld [vmem:[#allocation9 + $0x90] sm:$0xff]
    %v387 = vld [vmem:[#allocation9 + $0x98] sm:$0xf]
    %v388 = vld [vmem:[#allocation9 + $0x9c] sm:$0xff]
    %v389 = vld [vmem:[#allocation9 + $0xa4] sm:$0xf]
    %v390 = vld [vmem:[#allocation9 + $0xa8] sm:$0xff]
    %v391 = vld [vmem:[#allocation9 + $0xb0] sm:$0xf]
    %v392 = vld [vmem:[#allocation9 + $0xb4] sm:$0xff]
    %v393 = vld [vmem:[#allocation9 + $0xbc] sm:$0xf]
    %v394 = vld [vmem:[%s5] sm:$0x7]
    %v427 = vunpack.c.l.b16 %v362
    %v428 = vunpack.c.h.b16 %v362
    %v429 = vunpack.c.l.b16 %v363
    %v430 = vunpack.c.l.b16 %v364
    %v431 = vunpack.c.h.b16 %v364
    %v432 = vunpack.c.l.b16 %v365
    %v433 = vunpack.c.l.b16 %v366
    %v434 = vunpack.c.h.b16 %v366
    %v435 = vunpack.c.l.b16 %v367
    %v436 = vunpack.c.l.b16 %v368
    %v437 = vunpack.c.h.b16 %v368
    %v438 = vunpack.c.l.b16 %v369
    %v439 = vunpack.c.l.b16 %v370
    %v440 = vunpack.c.h.b16 %v370
    %v441 = vunpack.c.l.b16 %v371
    %v442 = vunpack.c.l.b16 %v372
    %v443 = vunpack.c.h.b16 %v372
    %v444 = vunpack.c.l.b16 %v373
    %v445 = vunpack.c.l.b16 %v374
    %v446 = vunpack.c.h.b16 %v374
    %v447 = vunpack.c.l.b16 %v375
    %v448 = vunpack.c.l.b16 %v376
    %v449 = vunpack.c.h.b16 %v376
    %v450 = vunpack.c.l.b16 %v377
    %v451 = vunpack.c.l.b16 %v378
    %v452 = vunpack.c.h.b16 %v378
    %v453 = vunpack.c.l.b16 %v379
    %v454 = vunpack.c.l.b16 %v380
    %v455 = vunpack.c.h.b16 %v380
    %v456 = vunpack.c.l.b16 %v381
    %v457 = vunpack.c.l.b16 %v382
    %v458 = vunpack.c.h.b16 %v382
    %v459 = vunpack.c.l.b16 %v383
    %v460 = vunpack.c.l.b16 %v384
    %v461 = vunpack.c.h.b16 %v384
    %v462 = vunpack.c.l.b16 %v385
    %v463 = vunpack.c.l.b16 %v386
    %v464 = vunpack.c.h.b16 %v386
    %v465 = vunpack.c.l.b16 %v387
    %v466 = vunpack.c.l.b16 %v388
    %v467 = vunpack.c.h.b16 %v388
    %v468 = vunpack.c.l.b16 %v389
    %v469 = vunpack.c.l.b16 %v390
    %v470 = vunpack.c.h.b16 %v390
    %v471 = vunpack.c.l.b16 %v391
    %v472 = vunpack.c.l.b16 %v392
    %v473 = vunpack.c.h.b16 %v392
    %v474 = vunpack.c.l.b16 %v393
    %v475 = vpack.c.b16 %v430, %v427
    %v476 = vpack.c.b16 %v431, %v428
    %v477 = vpack.c.b16 %v432, %v429
    %v478 = vpack.c.b16 %v436, %v433
    %v479 = vpack.c.b16 %v437, %v434
    %v480 = vpack.c.b16 %v438, %v435
    %v481 = vpack.c.b16 %v442, %v439
    %v482 = vpack.c.b16 %v443, %v440
    %v483 = vpack.c.b16 %v444, %v441
    %v484 = vpack.c.b16 %v448, %v445
    %v485 = vpack.c.b16 %v449, %v446
    %v486 = vpack.c.b16 %v450, %v447
    %v487 = vpack.c.b16 %v454, %v451
    %v488 = vpack.c.b16 %v455, %v452
    %v489 = vpack.c.b16 %v456, %v453
    %v490 = vpack.c.b16 %v460, %v457
    %v491 = vpack.c.b16 %v461, %v458
    %v492 = vpack.c.b16 %v462, %v459
    %v493 = vpack.c.b16 %v466, %v463
    %v494 = vpack.c.b16 %v467, %v464
    %v495 = vpack.c.b16 %v468, %v465
    %v496 = vpack.c.b16 %v472, %v469
    %v497 = vpack.c.b16 %v473, %v470
    %v498 = vpack.c.b16 %v474, %v471
    %v524 = vlaneseq
    %v525 = vshrl.u32 %v524, 7
    %v526 = vsub.s32 0, %v525
    %v527 = vrot.slane %v394, %v526
    %v528 = vlaneseq
    %v529 = vshrl.u32 %v528, 7
    %v530 = vsub.s32 1, %v529
    %v531 = vrot.slane %v394, %v530
    %v532 = vlaneseq
    %v533 = vshrl.u32 %v532, 7
    %v534 = vsub.s32 2, %v533
    %v535 = vrot.slane %v394, %v534
    %539 = vmatprep.subr.bf16.mxu0 %v476
    %540 = vmatpush1.bf16.msra.mxu0 %v475
    %541 = vmatprep.subr.bf16.mxu0 %v479
    %542 = vmatpush1.bf16.msra.mxu0 %v478
    %543 = vmatprep.subr.bf16.mxu0 %v482
    %544 = vmatpush1.bf16.msra.mxu0 %v481
    %545 = vmatprep.subr.bf16.mxu0 %v485
    %546 = vmatpush1.bf16.msra.mxu0 %v484
    %547 = vmatprep.subr.bf16.mxu0 %v488
    %548 = vmatpush1.bf16.msra.mxu0 %v487
    %549 = vmatprep.subr.bf16.mxu0 %v491
    %550 = vmatpush1.bf16.msra.mxu0 %v490
    %551 = vmatprep.subr.bf16.mxu0 %v494
    %552 = vmatpush1.bf16.msra.mxu0 %v493
    %553 = vmatprep.subr.bf16.mxu0 %v497
    %554 = vmatpush1.bf16.msra.mxu0 %v496
    %555 = vmatprep.subr.bf16.mxu0 0
    %556 = vmatpush1.bf16.msra.mxu0 0
    %557 = vmatprep.subr.bf16.mxu0 0
    %558 = vmatpush1.bf16.msra.mxu0 0
    %559 = vmatprep.subr.bf16.mxu0 0
    %560 = vmatpush1.bf16.msra.mxu0 0
    %561 = vmatprep.subr.bf16.mxu0 0
    %562 = vmatpush1.bf16.msra.mxu0 0
    %563 = vmatprep.subr.bf16.mxu0 0
    %564 = vmatpush1.bf16.msra.mxu0 0
    %565 = vmatprep.subr.bf16.mxu0 0
    %566 = vmatpush1.bf16.msra.mxu0 0
    %567 = vmatprep.subr.bf16.mxu0 0
    %568 = vmatpush1.bf16.msra.mxu0 0
    %569 = vmatprep.subr.bf16.mxu0 0
    %570 = vmatpush1.bf16.msra.mxu0 0
    %571 = vmatprep.mubr.bf16.mxu0 0
    %572 = vmatmul.mubr.bf16.gmra.mrb[0].mxu0 %v361
    %v573 = vpop.f32.mrb[0].mxu0
    %v574 = vadd.f32 %v527, %v573
    %v575 = vpop.f32.mrb[0].mxu0
    %v576 = vadd.f32 %v531, %v575
    %v577 = vpop.f32.mrb[0].mxu0
    %v578 = vpop.f32.mrb[0].mxu0
    %579 = vdwg.mxu0
    %580 = vmatprep.subr.bf16.mxu0 0
    %581 = vmatpush1.bf16.msra.mxu0 %v477
    %582 = vmatprep.subr.bf16.mxu0 0
    %583 = vmatpush1.bf16.msra.mxu0 %v480
    %584 = vmatprep.subr.bf16.mxu0 0
    %585 = vmatpush1.bf16.msra.mxu0 %v483
    %586 = vmatprep.subr.bf16.mxu0 0
    %587 = vmatpush1.bf16.msra.mxu0 %v486
    %588 = vmatprep.subr.bf16.mxu0 0
    %589 = vmatpush1.bf16.msra.mxu0 %v489
    %590 = vmatprep.subr.bf16.mxu0 0
    %591 = vmatpush1.bf16.msra.mxu0 %v492
    %592 = vmatprep.subr.bf16.mxu0 0
    %593 = vmatpush1.bf16.msra.mxu0 %v495
    %594 = vmatprep.subr.bf16.mxu0 0
    %595 = vmatpush1.bf16.msra.mxu0 %v498
    %596 = vmatprep.subr.bf16.mxu0 0
    %597 = vmatpush1.bf16.msra.mxu0 0
    %598 = vmatprep.subr.bf16.mxu0 0
    %599 = vmatpush1.bf16.msra.mxu0 0
    %600 = vmatprep.subr.bf16.mxu0 0
    %601 = vmatpush1.bf16.msra.mxu0 0
    %602 = vmatprep.subr.bf16.mxu0 0
    %603 = vmatpush1.bf16.msra.mxu0 0
    %604 = vmatprep.subr.bf16.mxu0 0
    %605 = vmatpush1.bf16.msra.mxu0 0
    %606 = vmatprep.subr.bf16.mxu0 0
    %607 = vmatpush1.bf16.msra.mxu0 0
    %608 = vmatprep.subr.bf16.mxu0 0
    %609 = vmatpush1.bf16.msra.mxu0 0
    %610 = vmatprep.subr.bf16.mxu0 0
    %611 = vmatpush1.bf16.msra.mxu0 0
    %612 = vmatprep.mubr.bf16.mxu0 0
    %613 = vmatmul.mubr.bf16.gmra.mrb[0].mxu0 %v361
    %v614 = vpop.f32.mrb[0].mxu0
    %v615 = vadd.f32 %v535, %v614
    %v616 = vpop.f32.mrb[0].mxu0
    %v617 = vpop.f32.mrb[0].mxu0
    %v618 = vpop.f32.mrb[0].mxu0
    %619 = vdwg.mxu0
    %v620 = vadd.f32 %v360, %v574
    %v621 = vxor.u32 %v620, 2147483648
    %v622 = vmul.f32 %v621, 1.442695
    %v623 = vpow.pop %v622
    %v624 = vadd.f32 %v623, 1.0
    %v625 = vrcp.pop %v624
    %v626 = vmul.f32 1.0, %v625
    %v628 = vrot.slane %v360, 1
    %v630 = vadd.f32 %v628, %v576
    %v631 = vxor.u32 %v630, 2147483648
    %v632 = vmul.f32 %v631, 1.442695
    %v633 = vpow.pop %v632
    %v634 = vadd.f32 %v633, 1.0
    %v635 = vrcp.pop %v634
    %v636 = vmul.f32 1.0, %v635
    %v637 = vmul.f32 %v626, %v615
    %v638 = vrot.slane %v360, 2
    %v640 = vadd.f32 %v638, %v637
    %v641 = vtanh.pop %v640
    %v642 = vsub.f32 1.0, %v636
    %v643 = vmul.f32 %v642, %v641
    %v644 = vmul.f32 %v636, %v359
    %v645 = vadd.f32 %v643, %v644
    %646 = vst [vmem:[#allocation3] sm:$0x1] %v645
    %647 = vst [vmem:[#allocation10] sm:$0x1] %v645
    // Predicated region
    $region38: #{tpu_custom_call.1} parent=1 // pred_check
      _
    $region39: #{tpu_custom_call.1} parent=1 // pred_check_branch
      %649 = sbr.rel (0) target = $region41
    $region40: #{tpu_custom_call.1} parent=1 // pred_region
      %s651 = ssub.s32 128, 128
      %652 = vsyncadd [#allocation6], %s651
      %s654 = sshll.u32 [#allocation10], 4
      %s655 = int_to_ptr.vmem [resolvable:$true] %s654
      %657 = dma.vmem_to_hbm [thread:$0]  %s655, 128, %s6, [#allocation6]
    $region41: #{tpu_custom_call.1} parent=1 // pred_fallthru
      _
    // Predicated region
    $region42: #{tpu_custom_call.1} parent=1 // pred_check
      _
    $region43: #{tpu_custom_call.1} parent=1 // pred_check_branch
      %659 = sbr.rel (0) target = $region45
    $region44: #{tpu_custom_call.1} parent=1 // pred_region
      %660 = dma.done [#allocation6], 128
    $region45: #{tpu_custom_call.1} parent=1 // pred_fallthru
      _
    %661 = vsyncpa [#allocation5], 1
    %662 = vsyncpa [#allocation8], 1
    %663 = vsyncpa [#allocation6], 1

</llo_original>
